<compile_context>
chip_gen: v7x
topology: tpu7x:2x2x1
jax: 0.10.0
libtpu: 0.0.40
codegen_flags: <defaults>
</compile_context>

<pallas_src>
import jax
import jax.numpy as jnp
from jax.experimental import pallas as pl
from jax.experimental.pallas import tpu as pltpu


def _log_sigmoid(x):
    # numerically stable log(sigmoid(x)) = min(x, 0) - log1p(exp(-|x|))
    return jnp.minimum(x, 0.0) - jnp.log1p(jnp.exp(-jnp.abs(x)))


def _round_up(x, m):
    return ((x + m - 1) // m) * m


def word2vec_loss(u_emb_table, v_emb_table, u_pos, v_pos, v_neg,
                  batch_size=None, tb=None):
    """Forward pass of Word2Vec: returns the scalar negative-sampling loss.

    u_emb_table, v_emb_table: (V, D) f32
    u_pos: (B, Lu) int32   v_pos: (B, Lv) int32   v_neg: (B, Ln) int32
    `batch_size` is accepted for signature parity with the PyTorch forward
    (unused there too -- the loss uses .mean()).
    """
    B, Lu = u_pos.shape
    _, Lv = v_pos.shape
    _, Ln = v_neg.shape
    V, D = u_emb_table.shape

    LANE = 128
    if tb is None:
        tb = min(512, _round_up(B, LANE))
    tb = max(LANE, _round_up(int(tb), LANE))

    # ---- explicit VMEM budget -> tile size + vmem_limit_bytes -------------
    table_bytes = 2 * V * D * 4                      # both tables, VMEM-resident

    def _stream_bytes(t):                            # double-buffered per-tile streams
        return 2 * ((Lu + Lv + Ln) * t * 4 + t * 4)

    VMEM_BUDGET = 48 * 1024 * 1024                   # fits v5e/v6e/v7x (v7x phys = 64 MiB)
    while tb > LANE and 2 * table_bytes + _stream_bytes(tb) > VMEM_BUDGET:
        tb -= LANE
    # TODO(synk): vocabularies whose tables do not fit VMEM need a scalar-prefetched
    # / manual-DMA row gather (P2/P4) instead of the resident-table path below.
    vmem_limit = int(min(VMEM_BUDGET,
                         max(16 * 1024 * 1024,
                             4 * (2 * table_bytes + _stream_bytes(tb)))))

    num_tiles = pl.cdiv(B, tb)
    B_pad = num_tiles * tb

    # ---- layout plumbing (tiny tensors; done once in the wrapper) ----------
    def _prep_idx(idx):
        idx = idx.astype(jnp.int32)
        if B_pad != B:
            idx = jnp.pad(idx, ((0, B_pad - B), (0, 0)))   # padded rows -> word 0
        return idx.T                                       # (L, B_pad): batch in lanes

    u_idx_t = _prep_idx(u_pos)    # (Lu, B_pad)
    vp_idx_t = _prep_idx(v_pos)   # (Lv, B_pad)
    vn_idx_t = _prep_idx(v_neg)   # (Ln, B_pad)

    u_tab_t = u_emb_table.astype(jnp.float32).T       # (D, V)
    v_tab_t = v_emb_table.astype(jnp.float32).T       # (D, V)

    def kernel(u_tab_ref, v_tab_ref, u_idx_ref, vp_idx_ref, vn_idx_ref, out_ref):
        u_tab = u_tab_ref[...]                         # (D, V)  VMEM-resident
        v_tab = v_tab_ref[...]                         # (D, V)  VMEM-resident
        vocab_iota = jax.lax.broadcasted_iota(jnp.int32, (V, tb), 0)

        def onehot(idx_row):                           # (tb,) -> (V, tb) f32 one-hot
            return (idx_row[None, :] == vocab_iota).astype(jnp.float32)

        def gathered_row_sum(idx_ref):
            # sum over L gathered v-embedding rows == (one-hot counts) @ table:
            # gather + accumulate fused into a single MXU matmul.
            idx = idx_ref[...]                         # (L, tb)
            cnt = onehot(idx[0])
            for l in range(1, idx.shape[0]):
                cnt = cnt + onehot(idx[l])
            return jnp.dot(v_tab, cnt, preferred_element_type=jnp.float32)  # (D, tb)

        sum_v = gathered_row_sum(vp_idx_ref)           # (D, tb) sum of context rows
        sum_n = gathered_row_sum(vn_idx_ref)           # (D, tb) sum of negative rows

        u_idx = u_idx_ref[...]                         # (Lu, tb)
        terms = jnp.zeros((1, tb), jnp.float32)
        for l in range(Lu):
            eu = jnp.dot(u_tab, onehot(u_idx[l]),
                         preferred_element_type=jnp.float32)       # (D, tb)
            pos = jnp.sum(eu * sum_v, axis=0, keepdims=True)       # (1, tb)
            neg = jnp.sum(eu * sum_n, axis=0, keepdims=True)       # (1, tb)
            terms = terms + _log_sigmoid(pos) + _log_sigmoid(-neg)

        out_ref[...] = terms[None]                     # (1, 1, tb) lane-dense store

    out = pl.pallas_call(
        kernel,
        out_shape=jax.ShapeDtypeStruct((num_tiles, 1, tb), jnp.float32),
        grid_spec=pltpu.PrefetchScalarGridSpec(
            num_scalar_prefetch=0,
            grid=(num_tiles,),
            in_specs=[
                pl.BlockSpec((D, V), lambda t: (0, 0)),     # u table (resident)
                pl.BlockSpec((D, V), lambda t: (0, 0)),     # v table (resident)
                pl.BlockSpec((Lu, tb), lambda t: (0, t)),
                pl.BlockSpec((Lv, tb), lambda t: (0, t)),
                pl.BlockSpec((Ln, tb), lambda t: (0, t)),
            ],
            out_specs=pl.BlockSpec((1, 1, tb), lambda t: (t, 0, 0)),
        ),
        compiler_params=pltpu.CompilerParams(
            # Batch tiles are fully independent (no shared accumulator).
            # TODO(synk): on v7x use pltpu.CORE_PARALLEL / pl.core_map to force
            # 2-TensorCore sharding of the batch axis.
            dimension_semantics=("parallel",),
            vmem_limit_bytes=vmem_limit,
        ),
    )(u_tab_t, v_tab_t, u_idx_t, vp_idx_t, vn_idx_t)

    # Per-row loss terms; drop rows that only exist because B was padded up to
    # a tile multiple, then take the mean (matches torch's loss.mean()).
    per_row = out.reshape(-1)[:B]
    return -jnp.sum(per_row) / float(B * Lu)


def ref_loss(u_emb_table, v_emb_table, u_pos, v_pos, v_neg):
    """Pure-JAX reference mirroring the PyTorch forward exactly."""
    embed_u = jnp.take(u_emb_table, u_pos, axis=0).transpose(0, 2, 1)  # (B, D, Lu)
    embed_v = jnp.take(v_emb_table, v_pos, axis=0)                     # (B, Lv, D)
    score = jnp.einsum("bvd,bdu->bvu", embed_v, embed_u)
    score = jnp.sum(score, axis=1)                                     # (B, Lu)
    log_target = jax.nn.log_sigmoid(score).squeeze()
    neg_embed_v = jnp.take(v_emb_table, v_neg, axis=0)                 # (B, Ln, D)
    neg_score = jnp.einsum("bnd,bdu->bnu", neg_embed_v, embed_u)
    neg_score = jnp.sum(neg_score, axis=1)                             # (B, Lu)
    sum_log_sampled = jax.nn.log_sigmoid(-neg_score).squeeze()
    loss = log_target + sum_log_sampled
    return -loss.mean()


if __name__ == "__main__":
    key = jax.random.PRNGKey(0)
    k1, k2, k3, k4, k5, k6, k7, k8 = jax.random.split(key, 8)

    vocab_size = 64        # len(word_to_idx)
    embedding_size = 32

    # init_emb(): both tables uniform(-1, 1) (initrange is computed but unused
    # in the reference PyTorch code).
    u_tbl = jax.random.uniform(k1, (vocab_size, embedding_size), jnp.float32, -1.0, 1.0)
    v_tbl = jax.random.uniform(k2, (vocab_size, embedding_size), jnp.float32, -1.0, 1.0)

    # Test 1: small batch (single tile; padded rows sliced off in the wrapper).
    B, Lu, Lv, Ln = 4, 1, 4, 3
    u_pos = jax.random.randint(k3, (B, Lu), 0, vocab_size, dtype=jnp.int32)
    v_pos = jax.random.randint(k4, (B, Lv), 0, vocab_size, dtype=jnp.int32)
    v_neg = jax.random.randint(k5, (B, Ln), 0, vocab_size, dtype=jnp.int32)

    loss = word2vec_loss(u_tbl, v_tbl, u_pos, v_pos, v_neg, batch_size=B)
    loss = jax.block_until_ready(loss)
    ref = ref_loss(u_tbl, v_tbl, u_pos, v_pos, v_neg)
    assert jnp.allclose(loss, ref, atol=1e-5, rtol=1e-5), (loss, ref)

    # Test 2: multi-tile grid (two batch tiles + padding slice exercised).
    B2 = 200
    u_pos2 = jax.random.randint(k6, (B2, Lu), 0, vocab_size, dtype=jnp.int32)
    v_pos2 = jax.random.randint(k7, (B2, Lv), 0, vocab_size, dtype=jnp.int32)
    v_neg2 = jax.random.randint(k8, (B2, Ln), 0, vocab_size, dtype=jnp.int32)

    loss2 = word2vec_loss(u_tbl, v_tbl, u_pos2, v_pos2, v_neg2, batch_size=B2, tb=128)
    loss2 = jax.block_until_ready(loss2)
    ref2 = ref_loss(u_tbl, v_tbl, u_pos2, v_pos2, v_neg2)
    assert jnp.allclose(loss2, ref2, atol=1e-5, rtol=1e-5), (loss2, ref2)

    print("KERNEL_OK")
</pallas_src>

<mosaic_0001>
module attributes {stable_mosaic.version = 11 : i64} {
  func.func @kernel(%arg0: i32, %arg1: memref<32x64xf32, #tpu.memory_space<vmem>>, %arg2: memref<32x64xf32, #tpu.memory_space<vmem>>, %arg3: memref<1x128xi32, #tpu.memory_space<vmem>>, %arg4: memref<4x128xi32, #tpu.memory_space<vmem>>, %arg5: memref<3x128xi32, #tpu.memory_space<vmem>>, %arg6: memref<1x1x128xf32, #tpu.memory_space<vmem>>) attributes {dimension_semantics = [#tpu.dimension_semantics<parallel>], iteration_bounds = array<i64: 1>, scalar_prefetch = 0 : i64, scratch_operands = 0 : i64, tpu.core_type = #tpu.core_type<tc>, window_params = [{pipeline_mode = #tpu.pipeline_mode<synchronous>, transform_indices = @transform_0, window_bounds = array<i64: 32, 64>}, {pipeline_mode = #tpu.pipeline_mode<synchronous>, transform_indices = @transform_1, window_bounds = array<i64: 32, 64>}, {transform_indices = @transform_2, window_bounds = array<i64: 1, 128>}, {transform_indices = @transform_3, window_bounds = array<i64: 4, 128>}, {transform_indices = @transform_4, window_bounds = array<i64: 3, 128>}, {transform_indices = @transform_5, window_bounds = array<i64: 1, 1, 128>}]} {
    %c0 = arith.constant 0 : index
    %c0_0 = arith.constant 0 : index
    %0 = vector.load %arg1[%c0, %c0_0] : memref<32x64xf32, #tpu.memory_space<vmem>>, vector<32x64xf32>
    %c0_1 = arith.constant 0 : index
    %c0_2 = arith.constant 0 : index
    %1 = vector.load %arg2[%c0_1, %c0_2] : memref<32x64xf32, #tpu.memory_space<vmem>>, vector<32x64xf32>
    %2 = tpu.iota {dimensions = array<i32: 0>} : vector<64x128xi32>
    %c0_3 = arith.constant 0 : index
    %c0_4 = arith.constant 0 : index
    %3 = vector.load %arg4[%c0_3, %c0_4] : memref<4x128xi32, #tpu.memory_space<vmem>>, vector<4x128xi32>
    %4 = vector.extract_strided_slice %3 {offsets = [0, 0], sizes = [1, 128], strides = [1, 1]} : vector<4x128xi32> to vector<1x128xi32>
    %5 = vector.shape_cast %4 : vector<1x128xi32> to vector<128xi32>
    %6 = vector.shape_cast %5 : vector<128xi32> to vector<1x128xi32>
    %7 = vector.broadcast %6 : vector<1x128xi32> to vector<64x128xi32>
    %8 = arith.cmpi eq, %7, %2 : vector<64x128xi32>
    %9 = arith.extui %8 : vector<64x128xi1> to vector<64x128xi32>
    %10 = arith.sitofp %9 : vector<64x128xi32> to vector<64x128xf32>
    %11 = vector.extract_strided_slice %3 {offsets = [1, 0], sizes = [1, 128], strides = [1, 1]} : vector<4x128xi32> to vector<1x128xi32>
    %12 = vector.shape_cast %11 : vector<1x128xi32> to vector<128xi32>
    %13 = vector.shape_cast %12 : vector<128xi32> to vector<1x128xi32>
    %14 = vector.broadcast %13 : vector<1x128xi32> to vector<64x128xi32>
    %15 = arith.cmpi eq, %14, %2 : vector<64x128xi32>
    %16 = arith.extui %15 : vector<64x128xi1> to vector<64x128xi32>
    %17 = arith.sitofp %16 : vector<64x128xi32> to vector<64x128xf32>
    %18 = arith.addf %10, %17 : vector<64x128xf32>
    %19 = vector.extract_strided_slice %3 {offsets = [2, 0], sizes = [1, 128], strides = [1, 1]} : vector<4x128xi32> to vector<1x128xi32>
    %20 = vector.shape_cast %19 : vector<1x128xi32> to vector<128xi32>
    %21 = vector.shape_cast %20 : vector<128xi32> to vector<1x128xi32>
    %22 = vector.broadcast %21 : vector<1x128xi32> to vector<64x128xi32>
    %23 = arith.cmpi eq, %22, %2 : vector<64x128xi32>
    %24 = arith.extui %23 : vector<64x128xi1> to vector<64x128xi32>
    %25 = arith.sitofp %24 : vector<64x128xi32> to vector<64x128xf32>
    %26 = arith.addf %18, %25 : vector<64x128xf32>
    %27 = vector.extract_strided_slice %3 {offsets = [3, 0], sizes = [1, 128], strides = [1, 1]} : vector<4x128xi32> to vector<1x128xi32>
    %28 = vector.shape_cast %27 : vector<1x128xi32> to vector<128xi32>
    %29 = vector.shape_cast %28 : vector<128xi32> to vector<1x128xi32>
    %30 = vector.broadcast %29 : vector<1x128xi32> to vector<64x128xi32>
    %31 = arith.cmpi eq, %30, %2 : vector<64x128xi32>
    %32 = arith.extui %31 : vector<64x128xi1> to vector<64x128xi32>
    %33 = arith.sitofp %32 : vector<64x128xi32> to vector<64x128xf32>
    %34 = arith.addf %26, %33 : vector<64x128xf32>
    %cst = arith.constant dense<0.000000e+00> : vector<32x128xf32>
    %35 = tpu.matmul %1, %34, %cst {dimension_numbers = #tpu.dot_dimension_numbers<[1], [0], [0], [1], [0, 0, 1, 1], [], []>} : vector<32x64xf32>, vector<64x128xf32>, vector<32x128xf32> -> vector<32x128xf32>
    %c0_5 = arith.constant 0 : index
    %c0_6 = arith.constant 0 : index
    %36 = vector.load %arg5[%c0_5, %c0_6] : memref<3x128xi32, #tpu.memory_space<vmem>>, vector<3x128xi32>
    %37 = vector.extract_strided_slice %36 {offsets = [0, 0], sizes = [1, 128], strides = [1, 1]} : vector<3x128xi32> to vector<1x128xi32>
    %38 = vector.shape_cast %37 : vector<1x128xi32> to vector<128xi32>
    %39 = vector.shape_cast %38 : vector<128xi32> to vector<1x128xi32>
    %40 = vector.broadcast %39 : vector<1x128xi32> to vector<64x128xi32>
    %41 = arith.cmpi eq, %40, %2 : vector<64x128xi32>
    %42 = arith.extui %41 : vector<64x128xi1> to vector<64x128xi32>
    %43 = arith.sitofp %42 : vector<64x128xi32> to vector<64x128xf32>
    %44 = vector.extract_strided_slice %36 {offsets = [1, 0], sizes = [1, 128], strides = [1, 1]} : vector<3x128xi32> to vector<1x128xi32>
    %45 = vector.shape_cast %44 : vector<1x128xi32> to vector<128xi32>
    %46 = vector.shape_cast %45 : vector<128xi32> to vector<1x128xi32>
    %47 = vector.broadcast %46 : vector<1x128xi32> to vector<64x128xi32>
    %48 = arith.cmpi eq, %47, %2 : vector<64x128xi32>
    %49 = arith.extui %48 : vector<64x128xi1> to vector<64x128xi32>
    %50 = arith.sitofp %49 : vector<64x128xi32> to vector<64x128xf32>
    %51 = arith.addf %43, %50 : vector<64x128xf32>
    %52 = vector.extract_strided_slice %36 {offsets = [2, 0], sizes = [1, 128], strides = [1, 1]} : vector<3x128xi32> to vector<1x128xi32>
    %53 = vector.shape_cast %52 : vector<1x128xi32> to vector<128xi32>
    %54 = vector.shape_cast %53 : vector<128xi32> to vector<1x128xi32>
    %55 = vector.broadcast %54 : vector<1x128xi32> to vector<64x128xi32>
    %56 = arith.cmpi eq, %55, %2 : vector<64x128xi32>
    %57 = arith.extui %56 : vector<64x128xi1> to vector<64x128xi32>
    %58 = arith.sitofp %57 : vector<64x128xi32> to vector<64x128xf32>
    %59 = arith.addf %51, %58 : vector<64x128xf32>
    %cst_7 = arith.constant dense<0.000000e+00> : vector<32x128xf32>
    %60 = tpu.matmul %1, %59, %cst_7 {dimension_numbers = #tpu.dot_dimension_numbers<[1], [0], [0], [1], [0, 0, 1, 1], [], []>} : vector<32x64xf32>, vector<64x128xf32>, vector<32x128xf32> -> vector<32x128xf32>
    %c0_8 = arith.constant 0 : index
    %c0_9 = arith.constant 0 : index
    %61 = vector.load %arg3[%c0_8, %c0_9] : memref<1x128xi32, #tpu.memory_space<vmem>>, vector<1x128xi32>
    %cst_10 = arith.constant 0.000000e+00 : f32
    %62 = vector.broadcast %cst_10 : f32 to vector<1x128xf32>
    %63 = vector.shape_cast %61 : vector<1x128xi32> to vector<128xi32>
    %64 = vector.shape_cast %63 : vector<128xi32> to vector<1x128xi32>
    %65 = vector.broadcast %64 : vector<1x128xi32> to vector<64x128xi32>
    %66 = arith.cmpi eq, %65, %2 : vector<64x128xi32>
    %67 = arith.extui %66 : vector<64x128xi1> to vector<64x128xi32>
    %68 = arith.sitofp %67 : vector<64x128xi32> to vector<64x128xf32>
    %cst_11 = arith.constant dense<0.000000e+00> : vector<32x128xf32>
    %69 = tpu.matmul %0, %68, %cst_11 {dimension_numbers = #tpu.dot_dimension_numbers<[1], [0], [0], [1], [0, 0, 1, 1], [], []>} : vector<32x64xf32>, vector<64x128xf32>, vector<32x128xf32> -> vector<32x128xf32>
    %70 = arith.mulf %69, %35 : vector<32x128xf32>
    %cst_12 = arith.constant dense<0.000000e+00> : vector<128xf32>
    %71 = vector.multi_reduction <add>, %70, %cst_12 [0] : vector<32x128xf32> to vector<128xf32>
    %72 = vector.shape_cast %71 : vector<128xf32> to vector<1x128xf32>
    %73 = arith.mulf %69, %60 : vector<32x128xf32>
    %cst_13 = arith.constant dense<0.000000e+00> : vector<128xf32>
    %74 = vector.multi_reduction <add>, %73, %cst_13 [0] : vector<32x128xf32> to vector<128xf32>
    %75 = vector.shape_cast %74 : vector<128xf32> to vector<1x128xf32>
    %cst_14 = arith.constant 0.000000e+00 : f32
    %76 = vector.broadcast %cst_14 : f32 to vector<1x128xf32>
    %77 = arith.minimumf %72, %76 : vector<1x128xf32>
    %78 = math.absf %72 : vector<1x128xf32>
    %cst_15 = arith.constant 0.000000e+00 : f32
    %79 = vector.broadcast %cst_15 : f32 to vector<1x128xf32>
    %80 = arith.subf %79, %78 : vector<1x128xf32>
    %81 = math.exp %80 : vector<1x128xf32>
    %82 = math.log1p %81 : vector<1x128xf32>
    %83 = arith.subf %77, %82 : vector<1x128xf32>
    %84 = arith.addf %62, %83 : vector<1x128xf32>
    %cst_16 = arith.constant 0.000000e+00 : f32
    %85 = vector.broadcast %cst_16 : f32 to vector<1x128xf32>
    %86 = arith.subf %85, %75 : vector<1x128xf32>
    %cst_17 = arith.constant 0.000000e+00 : f32
    %87 = vector.broadcast %cst_17 : f32 to vector<1x128xf32>
    %88 = arith.minimumf %86, %87 : vector<1x128xf32>
    %89 = math.absf %86 : vector<1x128xf32>
    %cst_18 = arith.constant 0.000000e+00 : f32
    %90 = vector.broadcast %cst_18 : f32 to vector<1x128xf32>
    %91 = arith.subf %90, %89 : vector<1x128xf32>
    %92 = math.exp %91 : vector<1x128xf32>
    %93 = math.log1p %92 : vector<1x128xf32>
    %94 = arith.subf %88, %93 : vector<1x128xf32>
    %95 = arith.addf %84, %94 : vector<1x128xf32>
    %96 = vector.shape_cast %95 : vector<1x128xf32> to vector<1x1x128xf32>
    %c0_19 = arith.constant 0 : index
    %c0_20 = arith.constant 0 : index
    %c0_21 = arith.constant 0 : index
    %97 = vector.load %arg6[%c0_19, %c0_20, %c0_21] : memref<1x1x128xf32, #tpu.memory_space<vmem>>, vector<1x1x128xf32>
    tpu.vector_store %arg6[%c0_19, %c0_20, %c0_21], %96 {strides = array<i32>} : memref<1x1x128xf32, #tpu.memory_space<vmem>>, vector<1x1x128xf32>,
    return
  }
  func.func @transform_0(%arg0: i32) -> (i32, i32) {
    %c0_i32 = arith.constant 0 : i32
    %c0_i32_0 = arith.constant 0 : i32
    %c0_i32_1 = arith.constant 0 : i32
    return %c0_i32, %c0_i32_0 : i32, i32
  }
  func.func @transform_1(%arg0: i32) -> (i32, i32) {
    %c0_i32 = arith.constant 0 : i32
    %c0_i32_0 = arith.constant 0 : i32
    %c0_i32_1 = arith.constant 0 : i32
    return %c0_i32, %c0_i32_0 : i32, i32
  }
  func.func @transform_2(%arg0: i32) -> (i32, i32) {
    %c0_i32 = arith.constant 0 : i32
    %c0_i32_0 = arith.constant 0 : i32
    return %c0_i32, %arg0 : i32, i32
  }
  func.func @transform_3(%arg0: i32) -> (i32, i32) {
    %c0_i32 = arith.constant 0 : i32
    %c0_i32_0 = arith.constant 0 : i32
    return %c0_i32, %arg0 : i32, i32
  }
  func.func @transform_4(%arg0: i32) -> (i32, i32) {
    %c0_i32 = arith.constant 0 : i32
    %c0_i32_0 = arith.constant 0 : i32
    return %c0_i32, %arg0 : i32, i32
  }
  func.func @transform_5(%arg0: i32) -> (i32, i32, i32) {
    %c0_i32 = arith.constant 0 : i32
    %c0_i32_0 = arith.constant 0 : i32
    %c0_i32_1 = arith.constant 0 : i32
    return %arg0, %c0_i32, %c0_i32_0 : i32, i32, i32
  }
}

</mosaic_0001>

<llo_original>
// kernel: tpu_custom_call.1
$region0: #{tpu_custom_call.1}
  #allocation0 [shape = 'u32[]', space=smem, size = 0x4, offset = 0x4, fixed_abs, tag = 'smem constant byte address 0x4 - core index']
  #allocation1 [shape = 'u32[144,128]{1,0:T(1,128)}', space=vmem, size = 0x12000, scoped, tag = 'internal scratch']
  %s0 = inlined_call_operand.hbm [shape: f32[32,64], index: 0, kind: input, shape index: {}]
  %s1 = inlined_call_operand.hbm [shape: f32[32,64], index: 1, kind: input, shape index: {}]
  %s2 = inlined_call_operand.vmem [shape: s32[1,128], index: 2, kind: input, shape index: {}]
  %s3 = inlined_call_operand.vmem [shape: s32[4,128], index: 3, kind: input, shape index: {}]
  %s4 = inlined_call_operand.vmem [shape: s32[3,128], index: 4, kind: input, shape index: {}]
  %s5 = inlined_call_operand.hbm [shape: f32[1,1,128], index: 5, kind: output, shape index: {}]
  %s6 = sld [smem:[#allocation0]]
  $region38: #{tpu_custom_call.1} parent=0
    _
  %s8 = ssub.s32 1, %s6
  %s9 = scalar_select 0, %s8, %s6
  $region1: #{tpu_custom_call.1} parent=0
    #allocation2 [shape = 'u8[16384]{0}', space=vmem, size = 0x4000, scoped, tag = 'input window, operand 0, single buffered']
    #allocation3 [shape = 's32[1]{0}', space=sflag, size = 0x4, scoped, tag = 'scoped memory for tpu_custom_call.1']
    #allocation4 [shape = 's32[1]{0}', space=sflag, size = 0x4, scoped, tag = 'scoped memory for tpu_custom_call.1']
    #allocation5 [shape = 'u8[16384]{0}', space=vmem, size = 0x4000, scoped, tag = 'input window, operand 1, single buffered']
    #allocation6 [shape = 's32[1]{0}', space=sflag, size = 0x4, scoped, tag = 'scoped memory for tpu_custom_call.1']
    #allocation7 [shape = 'u8[512]{0}', space=vmem, size = 0x400, scoped, tag = 'output window, operand 0, single buffered']
    %10 = vsyncpa [#allocation3], 0
    %11 = vsyncpa [#allocation6], 0
    %12 = vsyncpa [#allocation4], 0
    // Predicated region
    $region2: #{tpu_custom_call.1} parent=1 // pred_check
      _
    $region3: #{tpu_custom_call.1} parent=1 // pred_check_branch
      %14 = sbr.rel (0) target = $region5
    $region4: #{tpu_custom_call.1} parent=1 // pred_region
      %s16 = ssub.s32 512, 512
      %17 = vsyncadd [#allocation3], %s16
      %s18 = sshll.u32 [#allocation2], 4
      %s19 = int_to_ptr.vmem [resolvable:$true] %s18
      %24 = dma.hbm_to_vmem [thread:$0]  %s0, 512, %s19, [#allocation3], 128, 128, 8
    $region5: #{tpu_custom_call.1} parent=1 // pred_fallthru
      _
    // Predicated region
    $region6: #{tpu_custom_call.1} parent=1 // pred_check
      _
    $region7: #{tpu_custom_call.1} parent=1 // pred_check_branch
      %26 = sbr.rel (0) target = $region9
    $region8: #{tpu_custom_call.1} parent=1 // pred_region
      %s28 = ssub.s32 512, 512
      %29 = vsyncadd [#allocation6], %s28
      %s30 = sshll.u32 [#allocation5], 4
      %s31 = int_to_ptr.vmem [resolvable:$true] %s30
      %36 = dma.hbm_to_vmem [thread:$0]  %s1, 512, %s31, [#allocation6], 128, 128, 8
    $region9: #{tpu_custom_call.1} parent=1 // pred_fallthru
      _
    // Predicated region
    $region10: #{tpu_custom_call.1} parent=1 // pred_check
      _
    $region11: #{tpu_custom_call.1} parent=1 // pred_check_branch
      %38 = sbr.rel (0) target = $region13
    $region12: #{tpu_custom_call.1} parent=1 // pred_region
      _
    $region13: #{tpu_custom_call.1} parent=1 // pred_fallthru
      _
    // Predicated region
    $region14: #{tpu_custom_call.1} parent=1 // pred_check
      _
    $region15: #{tpu_custom_call.1} parent=1 // pred_check_branch
      %40 = sbr.rel (0) target = $region17
    $region16: #{tpu_custom_call.1} parent=1 // pred_region
      _
    $region17: #{tpu_custom_call.1} parent=1 // pred_fallthru
      _
    // Predicated region
    $region18: #{tpu_custom_call.1} parent=1 // pred_check
      _
    $region19: #{tpu_custom_call.1} parent=1 // pred_check_branch
      %42 = sbr.rel (0) target = $region21
    $region20: #{tpu_custom_call.1} parent=1 // pred_region
      _
    $region21: #{tpu_custom_call.1} parent=1 // pred_fallthru
      _
    // Predicated region
    $region22: #{tpu_custom_call.1} parent=1 // pred_check
      _
    $region23: #{tpu_custom_call.1} parent=1 // pred_check_branch
      %44 = sbr.rel (0) target = $region25
    $region24: #{tpu_custom_call.1} parent=1 // pred_region
      %45 = dma.done [#allocation3], 512
    $region25: #{tpu_custom_call.1} parent=1 // pred_fallthru
      _
    // Predicated region
    $region26: #{tpu_custom_call.1} parent=1 // pred_check
      _
    $region27: #{tpu_custom_call.1} parent=1 // pred_check_branch
      %47 = sbr.rel (0) target = $region29
    $region28: #{tpu_custom_call.1} parent=1 // pred_region
      %48 = dma.done [#allocation6], 512
    $region29: #{tpu_custom_call.1} parent=1 // pred_fallthru
      _
    %v49 = vld [vmem:[#allocation2] sm:$0xff]
    %v50 = vld [vmem:[#allocation2 + $0x8] sm:$0xff]
    %v51 = vld [vmem:[#allocation2 + $0x10] sm:$0xff]
    %v52 = vld [vmem:[#allocation2 + $0x18] sm:$0xff]
    %v53 = vld [vmem:[#allocation5] sm:$0xff]
    %v54 = vld [vmem:[#allocation5 + $0x8] sm:$0xff]
    %v55 = vld [vmem:[#allocation5 + $0x10] sm:$0xff]
    %v56 = vld [vmem:[#allocation5 + $0x18] sm:$0xff]
    %v57 = vlaneseq
    %v58 = vshrl.u32 %v57, 7
    %v59 = vadd.s32 %v58, 8
    %v60 = vadd.s32 %v58, 16
    %v61 = vadd.s32 %v58, 24
    %v62 = vadd.s32 %v58, 32
    %v63 = vadd.s32 %v58, 40
    %v64 = vadd.s32 %v58, 48
    %v65 = vadd.s32 %v58, 56
    %v66 = vld [vmem:[%s3] sm:$0xf]
    %v67 = vlaneseq
    %v68 = vshrl.u32 %v67, 7
    %v69 = vsub.s32 0, %v68
    %v70 = vrot.slane %v66, %v69
    %vm71 = vcmp.eq.s32.totalorder %v70, %v58
    %vm72 = vcmp.eq.s32.totalorder %v70, %v59
    %vm73 = vcmp.eq.s32.totalorder %v70, %v60
    %vm74 = vcmp.eq.s32.totalorder %v70, %v61
    %vm75 = vcmp.eq.s32.totalorder %v70, %v62
    %vm76 = vcmp.eq.s32.totalorder %v70, %v63
    %vm77 = vcmp.eq.s32.totalorder %v70, %v64
    %vm78 = vcmp.eq.s32.totalorder %v70, %v65
    %v79 = vsel %vm71, 1, 0
    %v80 = vsel %vm72, 1, 0
    %v81 = vsel %vm73, 1, 0
    %v82 = vsel %vm74, 1, 0
    %v83 = vsel %vm75, 1, 0
    %v84 = vsel %vm76, 1, 0
    %v85 = vsel %vm77, 1, 0
    %v86 = vsel %vm78, 1, 0
    %v87 = vcvt.s32.f32 %v79
    %v88 = vcvt.s32.f32 %v80
    %v89 = vcvt.s32.f32 %v81
    %v90 = vcvt.s32.f32 %v82
    %v91 = vcvt.s32.f32 %v83
    %v92 = vcvt.s32.f32 %v84
    %v93 = vcvt.s32.f32 %v85
    %v94 = vcvt.s32.f32 %v86
    %v95 = vlaneseq
    %v96 = vshrl.u32 %v95, 7
    %v97 = vsub.s32 1, %v96
    %v98 = vrot.slane %v66, %v97
    %vm99 = vcmp.eq.s32.totalorder %v98, %v58
    %vm100 = vcmp.eq.s32.totalorder %v98, %v59
    %vm101 = vcmp.eq.s32.totalorder %v98, %v60
    %vm102 = vcmp.eq.s32.totalorder %v98, %v61
    %vm103 = vcmp.eq.s32.totalorder %v98, %v62
    %vm104 = vcmp.eq.s32.totalorder %v98, %v63
    %vm105 = vcmp.eq.s32.totalorder %v98, %v64
    %vm106 = vcmp.eq.s32.totalorder %v98, %v65
    %v107 = vsel %vm99, 1, 0
    %v108 = vsel %vm100, 1, 0
    %v109 = vsel %vm101, 1, 0
    %v110 = vsel %vm102, 1, 0
    %v111 = vsel %vm103, 1, 0
    %v112 = vsel %vm104, 1, 0
    %v113 = vsel %vm105, 1, 0
    %v114 = vsel %vm106, 1, 0
    %v115 = vcvt.s32.f32 %v107
    %v116 = vcvt.s32.f32 %v108
    %v117 = vcvt.s32.f32 %v109
    %v118 = vcvt.s32.f32 %v110
    %v119 = vcvt.s32.f32 %v111
    %v120 = vcvt.s32.f32 %v112
    %v121 = vcvt.s32.f32 %v113
    %v122 = vcvt.s32.f32 %v114
    %v123 = vadd.f32 %v87, %v115
    %v124 = vadd.f32 %v88, %v116
    %v125 = vadd.f32 %v89, %v117
    %v126 = vadd.f32 %v90, %v118
    %v127 = vadd.f32 %v91, %v119
    %v128 = vadd.f32 %v92, %v120
    %v129 = vadd.f32 %v93, %v121
    %v130 = vadd.f32 %v94, %v122
    %v131 = vlaneseq
    %v132 = vshrl.u32 %v131, 7
    %v133 = vsub.s32 2, %v132
    %v134 = vrot.slane %v66, %v133
    %vm135 = vcmp.eq.s32.totalorder %v134, %v58
    %vm136 = vcmp.eq.s32.totalorder %v134, %v59
    %vm137 = vcmp.eq.s32.totalorder %v134, %v60
    %vm138 = vcmp.eq.s32.totalorder %v134, %v61
    %vm139 = vcmp.eq.s32.totalorder %v134, %v62
    %vm140 = vcmp.eq.s32.totalorder %v134, %v63
    %vm141 = vcmp.eq.s32.totalorder %v134, %v64
    %vm142 = vcmp.eq.s32.totalorder %v134, %v65
    %v143 = vsel %vm135, 1, 0
    %v144 = vsel %vm136, 1, 0
    %v145 = vsel %vm137, 1, 0
    %v146 = vsel %vm138, 1, 0
    %v147 = vsel %vm139, 1, 0
    %v148 = vsel %vm140, 1, 0
    %v149 = vsel %vm141, 1, 0
    %v150 = vsel %vm142, 1, 0
    %v151 = vcvt.s32.f32 %v143
    %v152 = vcvt.s32.f32 %v144
    %v153 = vcvt.s32.f32 %v145
    %v154 = vcvt.s32.f32 %v146
    %v155 = vcvt.s32.f32 %v147
    %v156 = vcvt.s32.f32 %v148
    %v157 = vcvt.s32.f32 %v149
    %v158 = vcvt.s32.f32 %v150
    %v159 = vadd.f32 %v123, %v151
    %v160 = vadd.f32 %v124, %v152
    %v161 = vadd.f32 %v125, %v153
    %v162 = vadd.f32 %v126, %v154
    %v163 = vadd.f32 %v127, %v155
    %v164 = vadd.f32 %v128, %v156
    %v165 = vadd.f32 %v129, %v157
    %v166 = vadd.f32 %v130, %v158
    %v167 = vlaneseq
    %v168 = vshrl.u32 %v167, 7
    %v169 = vsub.s32 3, %v168
    %v170 = vrot.slane %v66, %v169
    %vm171 = vcmp.eq.s32.totalorder %v170, %v58
    %vm172 = vcmp.eq.s32.totalorder %v170, %v59
    %vm173 = vcmp.eq.s32.totalorder %v170, %v60
    %vm174 = vcmp.eq.s32.totalorder %v170, %v61
    %vm175 = vcmp.eq.s32.totalorder %v170, %v62
    %vm176 = vcmp.eq.s32.totalorder %v170, %v63
    %vm177 = vcmp.eq.s32.totalorder %v170, %v64
    %vm178 = vcmp.eq.s32.totalorder %v170, %v65
    %v179 = vsel %vm171, 1, 0
    %v180 = vsel %vm172, 1, 0
    %v181 = vsel %vm173, 1, 0
    %v182 = vsel %vm174, 1, 0
    %v183 = vsel %vm175, 1, 0
    %v184 = vsel %vm176, 1, 0
    %v185 = vsel %vm177, 1, 0
    %v186 = vsel %vm178, 1, 0
    %v187 = vcvt.s32.f32 %v179
    %v188 = vcvt.s32.f32 %v180
    %v189 = vcvt.s32.f32 %v181
    %v190 = vcvt.s32.f32 %v182
    %v191 = vcvt.s32.f32 %v183
    %v192 = vcvt.s32.f32 %v184
    %v193 = vcvt.s32.f32 %v185
    %v194 = vcvt.s32.f32 %v186
    %v195 = vadd.f32 %v159, %v187
    %v196 = vadd.f32 %v160, %v188
    %v197 = vadd.f32 %v161, %v189
    %v198 = vadd.f32 %v162, %v190
    %v199 = vadd.f32 %v163, %v191
    %v200 = vadd.f32 %v164, %v192
    %v201 = vadd.f32 %v165, %v193
    %v202 = vadd.f32 %v166, %v194
    %vm203 = vcmask 523264
    %v205 = vsel %vm203, %v53, 0
    %v208 = vsel %vm203, %v54, 0
    %v211 = vsel %vm203, %v55, 0
    %v214 = vsel %vm203, %v56, 0
    %216 = vmatprep.subr.mxu0 0.0
    %217 = vmatpush1.msra.mxu0 %v195
    %218 = vmatprep.subr.mxu0 0.0
    %219 = vmatpush1.msra.mxu0 %v196
    %220 = vmatprep.subr.mxu0 0.0
    %221 = vmatpush1.msra.mxu0 %v197
    %222 = vmatprep.subr.mxu0 0.0
    %223 = vmatpush1.msra.mxu0 %v198
    %224 = vmatprep.subr.mxu0 0.0
    %225 = vmatpush1.msra.mxu0 %v199
    %226 = vmatprep.subr.mxu0 0.0
    %227 = vmatpush1.msra.mxu0 %v200
    %228 = vmatprep.subr.mxu0 0.0
    %229 = vmatpush1.msra.mxu0 %v201
    %230 = vmatprep.subr.mxu0 0.0
    %231 = vmatpush1.msra.mxu0 %v202
    %232 = vmatprep.subr.mxu0 0.0
    %233 = vmatpush1.msra.mxu0 0.0
    %234 = vmatprep.subr.mxu0 0.0
    %235 = vmatpush1.msra.mxu0 0.0
    %236 = vmatprep.subr.mxu0 0.0
    %237 = vmatpush1.msra.mxu0 0.0
    %238 = vmatprep.subr.mxu0 0.0
    %239 = vmatpush1.msra.mxu0 0.0
    %240 = vmatprep.subr.mxu0 0.0
    %241 = vmatpush1.msra.mxu0 0.0
    %242 = vmatprep.subr.mxu0 0.0
    %243 = vmatpush1.msra.mxu0 0.0
    %244 = vmatprep.subr.mxu0 0.0
    %245 = vmatpush1.msra.mxu0 0.0
    %246 = vmatprep.subr.mxu0 0.0
    %247 = vmatpush1.msra.mxu0 0.0
    %248 = vmatprep.subr.mxu0 0.0
    %249 = vmatpush1.msra.mxu0 0.0
    %250 = vmatprep.subr.mxu0 0.0
    %251 = vmatpush1.msra.mxu0 0.0
    %252 = vmatprep.subr.mxu0 0.0
    %253 = vmatpush1.msra.mxu0 0.0
    %254 = vmatprep.subr.mxu0 0.0
    %255 = vmatpush1.msra.mxu0 0.0
    %256 = vmatprep.subr.mxu0 0.0
    %257 = vmatpush1.msra.mxu0 0.0
    %258 = vmatprep.subr.mxu0 0.0
    %259 = vmatpush1.msra.mxu0 0.0
    %260 = vmatprep.subr.mxu0 0.0
    %261 = vmatpush1.msra.mxu0 0.0
    %262 = vmatprep.subr.mxu0 0.0
    %263 = vmatpush1.msra.mxu0 0.0
    %264 = vmatprep.subr.mxu0 0.0
    %265 = vmatpush1.msra.mxu0 0.0
    %266 = vmatprep.subr.mxu0 0.0
    %267 = vmatpush1.msra.mxu0 0.0
    %268 = vmatprep.subr.mxu0 0.0
    %269 = vmatpush1.msra.mxu0 0.0
    %270 = vmatprep.subr.mxu0 0.0
    %271 = vmatpush1.msra.mxu0 0.0
    %272 = vmatprep.subr.mxu0 0.0
    %273 = vmatpush1.msra.mxu0 0.0
    %274 = vmatprep.subr.mxu0 0.0
    %275 = vmatpush1.msra.mxu0 0.0
    %276 = vmatprep.subr.mxu0 0.0
    %277 = vmatpush1.msra.mxu0 0.0
    %278 = vmatprep.subr.mxu0 0.0
    %279 = vmatpush1.msra.mxu0 0.0
    %280 = vmatprep.mubr.f32.mxu0 0.0
    %281 = vmatmul.mubr.f32.gmra.mrb[0].mxu0 %v205
    %v282 = vpop.f32.mrb[0].mxu0
    %v283 = vadd.f32 0.0, %v282
    %v284 = vpop.f32.mrb[0].mxu0
    %285 = vmatprep.mubr.f32.mxu0 0.0
    %286 = vmatmul.mubr.f32.gmra.mrb[0].mxu0 %v208
    %v287 = vpop.f32.mrb[0].mxu0
    %v288 = vadd.f32 0.0, %v287
    %v289 = vpop.f32.mrb[0].mxu0
    %290 = vmatprep.mubr.f32.mxu0 0.0
    %291 = vmatmul.mubr.f32.gmra.mrb[0].mxu0 %v211
    %v292 = vpop.f32.mrb[0].mxu0
    %v293 = vadd.f32 0.0, %v292
    %v294 = vpop.f32.mrb[0].mxu0
    %295 = vmatprep.mubr.f32.mxu0 0.0
    %296 = vmatmul.mubr.f32.gmra.mrb[0].mxu0 %v214
    %v297 = vpop.f32.mrb[0].mxu0
    %v298 = vadd.f32 0.0, %v297
    %v299 = vpop.f32.mrb[0].mxu0
    %300 = vdwg.mxu0
    %v301 = vld [vmem:[%s4] sm:$0x7]
    %v302 = vlaneseq
    %v303 = vshrl.u32 %v302, 7
    %v304 = vsub.s32 0, %v303
    %v305 = vrot.slane %v301, %v304
    %vm306 = vcmp.eq.s32.totalorder %v305, %v58
    %vm307 = vcmp.eq.s32.totalorder %v305, %v59
    %vm308 = vcmp.eq.s32.totalorder %v305, %v60
    %vm309 = vcmp.eq.s32.totalorder %v305, %v61
    %vm310 = vcmp.eq.s32.totalorder %v305, %v62
    %vm311 = vcmp.eq.s32.totalorder %v305, %v63
    %vm312 = vcmp.eq.s32.totalorder %v305, %v64
    %vm313 = vcmp.eq.s32.totalorder %v305, %v65
    %v314 = vsel %vm306, 1, 0
    %v315 = vsel %vm307, 1, 0
    %v316 = vsel %vm308, 1, 0
    %v317 = vsel %vm309, 1, 0
    %v318 = vsel %vm310, 1, 0
    %v319 = vsel %vm311, 1, 0
    %v320 = vsel %vm312, 1, 0
    %v321 = vsel %vm313, 1, 0
    %v322 = vcvt.s32.f32 %v314
    %v323 = vcvt.s32.f32 %v315
    %v324 = vcvt.s32.f32 %v316
    %v325 = vcvt.s32.f32 %v317
    %v326 = vcvt.s32.f32 %v318
    %v327 = vcvt.s32.f32 %v319
    %v328 = vcvt.s32.f32 %v320
    %v329 = vcvt.s32.f32 %v321
    %v330 = vlaneseq
    %v331 = vshrl.u32 %v330, 7
    %v332 = vsub.s32 1, %v331
    %v333 = vrot.slane %v301, %v332
    %vm334 = vcmp.eq.s32.totalorder %v333, %v58
    %vm335 = vcmp.eq.s32.totalorder %v333, %v59
    %vm336 = vcmp.eq.s32.totalorder %v333, %v60
    %vm337 = vcmp.eq.s32.totalorder %v333, %v61
    %vm338 = vcmp.eq.s32.totalorder %v333, %v62
    %vm339 = vcmp.eq.s32.totalorder %v333, %v63
    %vm340 = vcmp.eq.s32.totalorder %v333, %v64
    %vm341 = vcmp.eq.s32.totalorder %v333, %v65
    %v342 = vsel %vm334, 1, 0
    %v343 = vsel %vm335, 1, 0
    %v344 = vsel %vm336, 1, 0
    %v345 = vsel %vm337, 1, 0
    %v346 = vsel %vm338, 1, 0
    %v347 = vsel %vm339, 1, 0
    %v348 = vsel %vm340, 1, 0
    %v349 = vsel %vm341, 1, 0
    %v350 = vcvt.s32.f32 %v342
    %v351 = vcvt.s32.f32 %v343
    %v352 = vcvt.s32.f32 %v344
    %v353 = vcvt.s32.f32 %v345
    %v354 = vcvt.s32.f32 %v346
    %v355 = vcvt.s32.f32 %v347
    %v356 = vcvt.s32.f32 %v348
    %v357 = vcvt.s32.f32 %v349
    %v358 = vadd.f32 %v322, %v350
    %v359 = vadd.f32 %v323, %v351
    %v360 = vadd.f32 %v324, %v352
    %v361 = vadd.f32 %v325, %v353
    %v362 = vadd.f32 %v326, %v354
    %v363 = vadd.f32 %v327, %v355
    %v364 = vadd.f32 %v328, %v356
    %v365 = vadd.f32 %v329, %v357
    %v366 = vlaneseq
    %v367 = vshrl.u32 %v366, 7
    %v368 = vsub.s32 2, %v367
    %v369 = vrot.slane %v301, %v368
    %vm370 = vcmp.eq.s32.totalorder %v369, %v58
    %vm371 = vcmp.eq.s32.totalorder %v369, %v59
    %vm372 = vcmp.eq.s32.totalorder %v369, %v60
    %vm373 = vcmp.eq.s32.totalorder %v369, %v61
    %vm374 = vcmp.eq.s32.totalorder %v369, %v62
    %vm375 = vcmp.eq.s32.totalorder %v369, %v63
    %vm376 = vcmp.eq.s32.totalorder %v369, %v64
    %vm377 = vcmp.eq.s32.totalorder %v369, %v65
    %v378 = vsel %vm370, 1, 0
    %v379 = vsel %vm371, 1, 0
    %v380 = vsel %vm372, 1, 0
    %v381 = vsel %vm373, 1, 0
    %v382 = vsel %vm374, 1, 0
    %v383 = vsel %vm375, 1, 0
    %v384 = vsel %vm376, 1, 0
    %v385 = vsel %vm377, 1, 0
    %v386 = vcvt.s32.f32 %v378
    %v387 = vcvt.s32.f32 %v379
    %v388 = vcvt.s32.f32 %v380
    %v389 = vcvt.s32.f32 %v381
    %v390 = vcvt.s32.f32 %v382
    %v391 = vcvt.s32.f32 %v383
    %v392 = vcvt.s32.f32 %v384
    %v393 = vcvt.s32.f32 %v385
    %v394 = vadd.f32 %v358, %v386
    %v395 = vadd.f32 %v359, %v387
    %v396 = vadd.f32 %v360, %v388
    %v397 = vadd.f32 %v361, %v389
    %v398 = vadd.f32 %v362, %v390
    %v399 = vadd.f32 %v363, %v391
    %v400 = vadd.f32 %v364, %v392
    %v401 = vadd.f32 %v365, %v393
    %402 = vmatprep.subr.mxu0 0.0
    %403 = vmatpush1.msra.mxu0 %v394
    %404 = vmatprep.subr.mxu0 0.0
    %405 = vmatpush1.msra.mxu0 %v395
    %406 = vmatprep.subr.mxu0 0.0
    %407 = vmatpush1.msra.mxu0 %v396
    %408 = vmatprep.subr.mxu0 0.0
    %409 = vmatpush1.msra.mxu0 %v397
    %410 = vmatprep.subr.mxu0 0.0
    %411 = vmatpush1.msra.mxu0 %v398
    %412 = vmatprep.subr.mxu0 0.0
    %413 = vmatpush1.msra.mxu0 %v399
    %414 = vmatprep.subr.mxu0 0.0
    %415 = vmatpush1.msra.mxu0 %v400
    %416 = vmatprep.subr.mxu0 0.0
    %417 = vmatpush1.msra.mxu0 %v401
    %418 = vmatprep.subr.mxu0 0.0
    %419 = vmatpush1.msra.mxu0 0.0
    %420 = vmatprep.subr.mxu0 0.0
    %421 = vmatpush1.msra.mxu0 0.0
    %422 = vmatprep.subr.mxu0 0.0
    %423 = vmatpush1.msra.mxu0 0.0
    %424 = vmatprep.subr.mxu0 0.0
    %425 = vmatpush1.msra.mxu0 0.0
    %426 = vmatprep.subr.mxu0 0.0
    %427 = vmatpush1.msra.mxu0 0.0
    %428 = vmatprep.subr.mxu0 0.0
    %429 = vmatpush1.msra.mxu0 0.0
    %430 = vmatprep.subr.mxu0 0.0
    %431 = vmatpush1.msra.mxu0 0.0
    %432 = vmatprep.subr.mxu0 0.0
    %433 = vmatpush1.msra.mxu0 0.0
    %434 = vmatprep.subr.mxu0 0.0
    %435 = vmatpush1.msra.mxu0 0.0
    %436 = vmatprep.subr.mxu0 0.0
    %437 = vmatpush1.msra.mxu0 0.0
    %438 = vmatprep.subr.mxu0 0.0
    %439 = vmatpush1.msra.mxu0 0.0
    %440 = vmatprep.subr.mxu0 0.0
    %441 = vmatpush1.msra.mxu0 0.0
    %442 = vmatprep.subr.mxu0 0.0
    %443 = vmatpush1.msra.mxu0 0.0
    %444 = vmatprep.subr.mxu0 0.0
    %445 = vmatpush1.msra.mxu0 0.0
    %446 = vmatprep.subr.mxu0 0.0
    %447 = vmatpush1.msra.mxu0 0.0
    %448 = vmatprep.subr.mxu0 0.0
    %449 = vmatpush1.msra.mxu0 0.0
    %450 = vmatprep.subr.mxu0 0.0
    %451 = vmatpush1.msra.mxu0 0.0
    %452 = vmatprep.subr.mxu0 0.0
    %453 = vmatpush1.msra.mxu0 0.0
    %454 = vmatprep.subr.mxu0 0.0
    %455 = vmatpush1.msra.mxu0 0.0
    %456 = vmatprep.subr.mxu0 0.0
    %457 = vmatpush1.msra.mxu0 0.0
    %458 = vmatprep.subr.mxu0 0.0
    %459 = vmatpush1.msra.mxu0 0.0
    %460 = vmatprep.subr.mxu0 0.0
    %461 = vmatpush1.msra.mxu0 0.0
    %462 = vmatprep.subr.mxu0 0.0
    %463 = vmatpush1.msra.mxu0 0.0
    %464 = vmatprep.subr.mxu0 0.0
    %465 = vmatpush1.msra.mxu0 0.0
    %466 = vmatprep.mubr.f32.mxu0 0.0
    %467 = vmatmul.mubr.f32.gmra.mrb[0].mxu0 %v205
    %v468 = vpop.f32.mrb[0].mxu0
    %v469 = vadd.f32 0.0, %v468
    %v470 = vpop.f32.mrb[0].mxu0
    %471 = vmatprep.mubr.f32.mxu0 0.0
    %472 = vmatmul.mubr.f32.gmra.mrb[0].mxu0 %v208
    %v473 = vpop.f32.mrb[0].mxu0
    %v474 = vadd.f32 0.0, %v473
    %v475 = vpop.f32.mrb[0].mxu0
    %476 = vmatprep.mubr.f32.mxu0 0.0
    %477 = vmatmul.mubr.f32.gmra.mrb[0].mxu0 %v211
    %v478 = vpop.f32.mrb[0].mxu0
    %v479 = vadd.f32 0.0, %v478
    %v480 = vpop.f32.mrb[0].mxu0
    %481 = vmatprep.mubr.f32.mxu0 0.0
    %482 = vmatmul.mubr.f32.gmra.mrb[0].mxu0 %v214
    %v483 = vpop.f32.mrb[0].mxu0
    %v484 = vadd.f32 0.0, %v483
    %v485 = vpop.f32.mrb[0].mxu0
    %486 = vdwg.mxu0
    %v487 = vld [vmem:[%s2] sm:$0x1]
    %v488 = vlaneseq
    %v489 = vshrl.u32 %v488, 7
    %v490 = vsub.s32 0, %v489
    %v491 = vrot.slane %v487, %v490
    %vm492 = vcmp.eq.s32.totalorder %v491, %v58
    %vm493 = vcmp.eq.s32.totalorder %v491, %v59
    %vm494 = vcmp.eq.s32.totalorder %v491, %v60
    %vm495 = vcmp.eq.s32.totalorder %v491, %v61
    %vm496 = vcmp.eq.s32.totalorder %v491, %v62
    %vm497 = vcmp.eq.s32.totalorder %v491, %v63
    %vm498 = vcmp.eq.s32.totalorder %v491, %v64
    %vm499 = vcmp.eq.s32.totalorder %v491, %v65
    %v500 = vsel %vm492, 1, 0
    %v501 = vsel %vm493, 1, 0
    %v502 = vsel %vm494, 1, 0
    %v503 = vsel %vm495, 1, 0
    %v504 = vsel %vm496, 1, 0
    %v505 = vsel %vm497, 1, 0
    %v506 = vsel %vm498, 1, 0
    %v507 = vsel %vm499, 1, 0
    %v508 = vcvt.s32.f32 %v500
    %v509 = vcvt.s32.f32 %v501
    %v510 = vcvt.s32.f32 %v502
    %v511 = vcvt.s32.f32 %v503
    %v512 = vcvt.s32.f32 %v504
    %v513 = vcvt.s32.f32 %v505
    %v514 = vcvt.s32.f32 %v506
    %v515 = vcvt.s32.f32 %v507
    %v517 = vsel %vm203, %v49, 0
    %v520 = vsel %vm203, %v50, 0
    %v523 = vsel %vm203, %v51, 0
    %v526 = vsel %vm203, %v52, 0
    %528 = vmatprep.subr.mxu0 0.0
    %529 = vmatpush1.msra.mxu0 %v508
    %530 = vmatprep.subr.mxu0 0.0
    %531 = vmatpush1.msra.mxu0 %v509
    %532 = vmatprep.subr.mxu0 0.0
    %533 = vmatpush1.msra.mxu0 %v510
    %534 = vmatprep.subr.mxu0 0.0
    %535 = vmatpush1.msra.mxu0 %v511
    %536 = vmatprep.subr.mxu0 0.0
    %537 = vmatpush1.msra.mxu0 %v512
    %538 = vmatprep.subr.mxu0 0.0
    %539 = vmatpush1.msra.mxu0 %v513
    %540 = vmatprep.subr.mxu0 0.0
    %541 = vmatpush1.msra.mxu0 %v514
    %542 = vmatprep.subr.mxu0 0.0
    %543 = vmatpush1.msra.mxu0 %v515
    %544 = vmatprep.subr.mxu0 0.0
    %545 = vmatpush1.msra.mxu0 0.0
    %546 = vmatprep.subr.mxu0 0.0
    %547 = vmatpush1.msra.mxu0 0.0
    %548 = vmatprep.subr.mxu0 0.0
    %549 = vmatpush1.msra.mxu0 0.0
    %550 = vmatprep.subr.mxu0 0.0
    %551 = vmatpush1.msra.mxu0 0.0
    %552 = vmatprep.subr.mxu0 0.0
    %553 = vmatpush1.msra.mxu0 0.0
    %554 = vmatprep.subr.mxu0 0.0
    %555 = vmatpush1.msra.mxu0 0.0
    %556 = vmatprep.subr.mxu0 0.0
    %557 = vmatpush1.msra.mxu0 0.0
    %558 = vmatprep.subr.mxu0 0.0
    %559 = vmatpush1.msra.mxu0 0.0
    %560 = vmatprep.subr.mxu0 0.0
    %561 = vmatpush1.msra.mxu0 0.0
    %562 = vmatprep.subr.mxu0 0.0
    %563 = vmatpush1.msra.mxu0 0.0
    %564 = vmatprep.subr.mxu0 0.0
    %565 = vmatpush1.msra.mxu0 0.0
    %566 = vmatprep.subr.mxu0 0.0
    %567 = vmatpush1.msra.mxu0 0.0
    %568 = vmatprep.subr.mxu0 0.0
    %569 = vmatpush1.msra.mxu0 0.0
    %570 = vmatprep.subr.mxu0 0.0
    %571 = vmatpush1.msra.mxu0 0.0
    %572 = vmatprep.subr.mxu0 0.0
    %573 = vmatpush1.msra.mxu0 0.0
    %574 = vmatprep.subr.mxu0 0.0
    %575 = vmatpush1.msra.mxu0 0.0
    %576 = vmatprep.subr.mxu0 0.0
    %577 = vmatpush1.msra.mxu0 0.0
    %578 = vmatprep.subr.mxu0 0.0
    %579 = vmatpush1.msra.mxu0 0.0
    %580 = vmatprep.subr.mxu0 0.0
    %581 = vmatpush1.msra.mxu0 0.0
    %582 = vmatprep.subr.mxu0 0.0
    %583 = vmatpush1.msra.mxu0 0.0
    %584 = vmatprep.subr.mxu0 0.0
    %585 = vmatpush1.msra.mxu0 0.0
    %586 = vmatprep.subr.mxu0 0.0
    %587 = vmatpush1.msra.mxu0 0.0
    %588 = vmatprep.subr.mxu0 0.0
    %589 = vmatpush1.msra.mxu0 0.0
    %590 = vmatprep.subr.mxu0 0.0
    %591 = vmatpush1.msra.mxu0 0.0
    %592 = vmatprep.mubr.f32.mxu0 0.0
    %593 = vmatmul.mubr.f32.gmra.mrb[0].mxu0 %v517
    %v594 = vpop.f32.mrb[0].mxu0
    %v595 = vadd.f32 0.0, %v594
    %v596 = vpop.f32.mrb[0].mxu0
    %597 = vmatprep.mubr.f32.mxu0 0.0
    %598 = vmatmul.mubr.f32.gmra.mrb[0].mxu0 %v520
    %v599 = vpop.f32.mrb[0].mxu0
    %v600 = vadd.f32 0.0, %v599
    %v601 = vpop.f32.mrb[0].mxu0
    %602 = vmatprep.mubr.f32.mxu0 0.0
    %603 = vmatmul.mubr.f32.gmra.mrb[0].mxu0 %v523
    %v604 = vpop.f32.mrb[0].mxu0
    %v605 = vadd.f32 0.0, %v604
    %v606 = vpop.f32.mrb[0].mxu0
    %607 = vmatprep.mubr.f32.mxu0 0.0
    %608 = vmatmul.mubr.f32.gmra.mrb[0].mxu0 %v526
    %v609 = vpop.f32.mrb[0].mxu0
    %v610 = vadd.f32 0.0, %v609
    %v611 = vpop.f32.mrb[0].mxu0
    %612 = vdwg.mxu0
    %v613 = vmul.f32 %v595, %v283
    %v614 = vmul.f32 %v600, %v288
    %v615 = vmul.f32 %v605, %v293
    %v616 = vmul.f32 %v610, %v298
    %v617 = vadd.f32 %v613, %v614
    %v618 = vadd.f32 %v617, %v615
    %v619 = vadd.f32 %v618, %v616
    %v620 = vrot.slane %v619, 4
    %v621 = vadd.f32 %v619, %v620
    %v622 = vrot.slane %v621, 2
    %v623 = vadd.f32 %v621, %v622
    %v624 = vrot.slane %v623, 1
    %v625 = vadd.f32 %v623, %v624
    %v626 = vmul.f32 %v595, %v469
    %v627 = vmul.f32 %v600, %v474
    %v628 = vmul.f32 %v605, %v479
    %v629 = vmul.f32 %v610, %v484
    %v630 = vadd.f32 %v626, %v627
    %v631 = vadd.f32 %v630, %v628
    %v632 = vadd.f32 %v631, %v629
    %v633 = vrot.slane %v632, 4
    %v634 = vadd.f32 %v632, %v633
    %v635 = vrot.slane %v634, 2
    %v636 = vadd.f32 %v634, %v635
    %v637 = vrot.slane %v636, 1
    %v638 = vadd.f32 %v636, %v637
    %v639 = vmin.f32 %v625, 0.0
    %v640 = vand.u32 2147483647, %v625
    %v641 = vsub.f32 0.0, %v640
    %v642 = vmul.f32 %v641, 1.442695
    %v643 = vpow.pop %v642
    %v644 = vadd.f32 %v643, 1.0
    %v645 = vlog2.pop %v644
    %v646 = vmul.f32 %v645, 0.6931472
    %v647 = vmul.f32 -0.5, %v643
    %v648 = vadd.f32 %v647, 1.0
    %v649 = vmul.f32 %v648, %v643
    %v650 = vand.u32 2147483647, %v643
    %vm651 = vcmp.lt.f32.partialorder %v650, 0.0004427343
    %v652 = vsel %vm651, %v649, %v646
    %v653 = vsub.f32 %v639, %v652
    %v654 = vadd.f32 %v653, 0.0
    %v655 = vsub.f32 0.0, %v638
    %v656 = vmin.f32 %v655, 0.0
    %v657 = vand.u32 2147483647, %v655
    %v658 = vsub.f32 0.0, %v657
    %v659 = vmul.f32 %v658, 1.442695
    %v660 = vpow.pop %v659
    %v661 = vadd.f32 %v660, 1.0
    %v662 = vlog2.pop %v661
    %v663 = vmul.f32 %v662, 0.6931472
    %v664 = vmul.f32 -0.5, %v660
    %v665 = vadd.f32 %v664, 1.0
    %v666 = vmul.f32 %v665, %v660
    %v667 = vand.u32 2147483647, %v660
    %vm668 = vcmp.lt.f32.partialorder %v667, 0.0004427343
    %v669 = vsel %vm668, %v666, %v663
    %v670 = vsub.f32 %v656, %v669
    %v671 = vadd.f32 %v654, %v670
    %672 = vst [vmem:[#allocation7] sm:$0x1] %v671
    // Predicated region
    $region30: #{tpu_custom_call.1} parent=1 // pred_check
      _
    $region31: #{tpu_custom_call.1} parent=1 // pred_check_branch
      %674 = sbr.rel (0) target = $region33
    $region32: #{tpu_custom_call.1} parent=1 // pred_region
      %s676 = ssub.s32 16, 16
      %677 = vsyncadd [#allocation4], %s676
      %s679 = sshll.u32 [#allocation7], 4
      %s680 = int_to_ptr.vmem [resolvable:$true] %s679
      %682 = dma.vmem_to_hbm [thread:$0]  %s680, 16, %s5, [#allocation4]
    $region33: #{tpu_custom_call.1} parent=1 // pred_fallthru
      _
    // Predicated region
    $region34: #{tpu_custom_call.1} parent=1 // pred_check
      _
    $region35: #{tpu_custom_call.1} parent=1 // pred_check_branch
      %684 = sbr.rel (0) target = $region37
    $region36: #{tpu_custom_call.1} parent=1 // pred_region
      %685 = dma.done [#allocation4], 16
    $region37: #{tpu_custom_call.1} parent=1 // pred_fallthru
      _
    %686 = vsyncpa [#allocation3], 1
    %687 = vsyncpa [#allocation6], 1
    %688 = vsyncpa [#allocation4], 1

</llo_original>
